<compile_context>
chip_gen: v7x
topology: tpu7x:2x2x1
jax: 0.10.0
libtpu: 0.0.40
codegen_flags: <defaults>
</compile_context>

<pallas_src>
import jax
import jax.numpy as jnp
from jax.experimental import pallas as pl
from jax.experimental.pallas import tpu as pltpu

INPUT_SIZE = 64
HIDDEN1 = 64
HIDDEN2 = 32
CLAMP_EPS = 1e-6


def disc_sa_kernel(x_ref, w1_ref, b1_ref, w2_ref, b2_ref, w3_ref, b3_ref,
                   out_ref):
    # x tile: (bt, 64).  Cast to bf16 for the MXU (no-op if already bf16).
    x = x_ref[...].astype(jnp.bfloat16)

    # Layer 1: Linear(64, 64) + ReLU   (MXU, bf16 inputs, f32 accumulation)
    h1 = jnp.dot(x, w1_ref[...], preferred_element_type=jnp.float32) + b1_ref[...]
    h1 = jnp.maximum(h1, 0.0)
    # TODO(synk): nn.Dropout(0.3) skipped — identity in eval-mode forward.

    # Layer 2: Linear(64, 32) + ReLU   (MXU, bf16 inputs, f32 accumulation)
    h2 = jnp.dot(h1.astype(jnp.bfloat16), w2_ref[...],
                 preferred_element_type=jnp.float32) + b2_ref[...]
    h2 = jnp.maximum(h2, 0.0)                                  # (bt, 32) f32

    # Layer 3: Linear(32, 1), kept off the MXU (N=1 wastes 127/128 result lanes).
    # Move the batch axis from sublanes to lanes (single f32 XLU transpose, its
    # slot is otherwise idle) so the result is a lane-dense (1, bt) row and the
    # output store is unmasked.
    h2_t = h2.T                                                # (32, bt) f32
    logit = jnp.sum(h2_t * w3_ref[...], axis=0, keepdims=True) + b3_ref[...]  # (1, bt)

    # sigmoid + clamp (exact f32 on the VPU/EUP)
    v = 1.0 / (1.0 + jnp.exp(-logit))
    v = jnp.clip(v, CLAMP_EPS, 1.0 - CLAMP_EPS)
    out_ref[...] = v.reshape(out_ref.shape)                    # (1, 1, bt)


def _round_up(n, m):
    return ((n + m - 1) // m) * m


def _choose_tile(B, block_b):
    """Pick the batch tile size bt and grid size."""
    block_b = max(8, (block_b // 8) * 8)
    if B <= 8:
        bt = B                               # full-extent block: always legal
    else:
        # >= 2 tiles whenever possible (both v7x TensorCores get work via the
        # "parallel" batch axis), lane-aligned (multiple of 128) when possible,
        # multiple of 8 always, and capped at block_b rows so VMEM usage is
        # bounded independently of B.
        bt = min(block_b, _round_up(pl.cdiv(B, 2), 128), (B // 8) * 8)
        bt = max(bt, 8)
    return bt, pl.cdiv(B, bt)


def disc_sa_forward(state_action, params, *, block_b=4096):
    """state_action: (B, 64) float32 or bfloat16 -> (B, 1) float32 in (1e-6, 1-1e-6).

    Pass bfloat16 state_action to halve the dominant HBM read; numerics are the
    bf16-input / f32-accumulate MXU path either way.
    On v5e keep block_b <= 4096; on v7x block_b up to 8192-16384 is profitable.
    """
    x = state_action
    if x.dtype not in (jnp.bfloat16, jnp.float32):
        x = x.astype(jnp.float32)
    B, F = x.shape
    assert F == INPUT_SIZE, F

    bt, grid_b = _choose_tile(B, block_b)

    # Weights / biases: constant index_map -> DMA'd once, resident in VMEM.
    def resident(shape):
        return pl.BlockSpec(shape, lambda i, _n=len(shape): (0,) * _n)

    out3 = pl.pallas_call(
        disc_sa_kernel,
        # Lane-dense output slab: one (1, bt) row per tile.
        out_shape=jax.ShapeDtypeStruct((grid_b, 1, bt), jnp.float32),
        grid=(grid_b,),
        in_specs=[
            pl.BlockSpec((bt, INPUT_SIZE), lambda i: (i, 0)),   # state_action tile
            resident((INPUT_SIZE, HIDDEN1)),                    # w1 (64, 64) bf16
            resident((1, HIDDEN1)),                             # b1 (1, 64) f32
            resident((HIDDEN1, HIDDEN2)),                       # w2 (64, 32) bf16
            resident((1, HIDDEN2)),                             # b2 (1, 32) f32
            resident((HIDDEN2, 1)),                             # w3 (32, 1) f32 column
            resident((1, 1)),                                   # b3 (1, 1) f32
        ],
        out_specs=pl.BlockSpec((1, 1, bt), lambda i: (i, 0, 0)),
        compiler_params=pltpu.CompilerParams(
            dimension_semantics=("parallel",),                  # megacore on v7x
            vmem_limit_bytes=(64 * 1024 * 1024 if bt >= 8192 else None),
        ),
    )(
        x,
        params["w1"], params["b1"],
        params["w2"], params["b2"],
        params["w3"], params["b3"],
    )

    # Layout plumbing only: (grid_b, 1, bt) -> (B, 1), dropping padded tail rows.
    return out3.reshape(grid_b * bt, 1)[:B]


def init_params(key):
    """PyTorch nn.Linear default init (uniform +/- 1/sqrt(fan_in)).

    w1/w2 stored (in, out) in bf16 (MXU-native); biases f32; w3 stored as a
    (32, 1) f32 column (for the VPU multiply + sublane reduce); b3 (1, 1) f32.
    """
    ks = jax.random.split(key, 6)

    def lin(kw, kb, fan_in, fan_out):
        bound = 1.0 / (fan_in ** 0.5)
        w = jax.random.uniform(kw, (fan_in, fan_out), jnp.float32, -bound, bound)
        b = jax.random.uniform(kb, (1, fan_out), jnp.float32, -bound, bound)
        return w, b

    w1, b1 = lin(ks[0], ks[1], INPUT_SIZE, HIDDEN1)   # Linear(64, 64)
    w2, b2 = lin(ks[2], ks[3], HIDDEN1, HIDDEN2)      # Linear(64, 32)
    w3, b3 = lin(ks[4], ks[5], HIDDEN2, 1)            # Linear(32, 1)
    return dict(
        w1=w1.astype(jnp.bfloat16), b1=b1,
        w2=w2.astype(jnp.bfloat16), b2=b2,
        w3=w3, b3=b3,
    )


def reference_forward(x, p):
    """Mirrors the kernel's numerics (bf16 matmul inputs, f32 accumulation)."""
    xb = x.astype(jnp.bfloat16)
    h1 = jnp.dot(xb, p["w1"], preferred_element_type=jnp.float32) + p["b1"]
    h1 = jnp.maximum(h1, 0.0)
    h2 = jnp.dot(h1.astype(jnp.bfloat16), p["w2"],
                 preferred_element_type=jnp.float32) + p["b2"]
    h2 = jnp.maximum(h2, 0.0)
    logit = jnp.sum(h2 * p["w3"].T, axis=-1, keepdims=True) + p["b3"]
    v = 1.0 / (1.0 + jnp.exp(-logit))
    return jnp.clip(v, CLAMP_EPS, 1.0 - CLAMP_EPS)


def reference_forward_f32(x, p):
    """All-f32 reference (PyTorch-style numerics) for a loose sanity check."""
    xf = x.astype(jnp.float32)
    h1 = jnp.maximum(xf @ p["w1"].astype(jnp.float32) + p["b1"], 0.0)
    h2 = jnp.maximum(h1 @ p["w2"].astype(jnp.float32) + p["b2"], 0.0)
    logit = jnp.sum(h2 * p["w3"].T.astype(jnp.float32), axis=-1, keepdims=True) + p["b3"]
    v = 1.0 / (1.0 + jnp.exp(-logit))
    return jnp.clip(v, CLAMP_EPS, 1.0 - CLAMP_EPS)


if __name__ == "__main__":
    key = jax.random.PRNGKey(0)
    k_param, k_x, k_x2 = jax.random.split(key, 3)

    params = init_params(k_param)

    # Small single-tile check (f32 input path).
    B = 8
    x = jax.random.normal(k_x, (B, INPUT_SIZE), jnp.float32)
    out = jax.block_until_ready(disc_sa_forward(x, params))
    ref = reference_forward(x, params)
    assert out.shape == (B, 1), out.shape
    assert jnp.allclose(out, ref, atol=1e-4, rtol=1e-4), (out, ref)
    assert bool(jnp.all((out >= CLAMP_EPS) & (out <= 1.0 - CLAMP_EPS)))

    # Gridded check: multiple batch tiles, ragged tail (B2 % bt != 0),
    # bf16 input (halves the dominant HBM read).
    B2 = 1000
    x2 = jax.random.normal(k_x2, (B2, INPUT_SIZE), jnp.float32).astype(jnp.bfloat16)
    out2 = jax.block_until_ready(disc_sa_forward(x2, params))
    ref2 = reference_forward(x2, params)
    assert out2.shape == (B2, 1), out2.shape
    assert jnp.allclose(out2, ref2, atol=1e-4, rtol=1e-4)

    # Loose sanity check vs. an all-f32 reference (bf16 matmul passes expected).
    ref2_f32 = reference_forward_f32(x2, params)
    assert jnp.allclose(out2, ref2_f32, atol=3e-2)

    print("KERNEL_OK")
</pallas_src>

<mosaic_0001>
module attributes {stable_mosaic.version = 11 : i64} {
  func.func @disc_sa_kernel(%arg0: i32, %arg1: memref<8x64xf32, #tpu.memory_space<vmem>>, %arg2: memref<64x64xbf16, #tpu.memory_space<vmem>>, %arg3: memref<1x64xf32, #tpu.memory_space<vmem>>, %arg4: memref<64x32xbf16, #tpu.memory_space<vmem>>, %arg5: memref<1x32xf32, #tpu.memory_space<vmem>>, %arg6: memref<32x1xf32, #tpu.memory_space<vmem>>, %arg7: memref<1x1xf32, #tpu.memory_space<vmem>>, %arg8: memref<1x1x8xf32, #tpu.memory_space<vmem>>) attributes {dimension_semantics = [#tpu.dimension_semantics<parallel>], iteration_bounds = array<i64: 1>, scalar_prefetch = 0 : i64, scratch_operands = 0 : i64, tpu.core_type = #tpu.core_type<tc>, window_params = [{transform_indices = @transform_0, window_bounds = array<i64: 8, 64>}, {pipeline_mode = #tpu.pipeline_mode<synchronous>, transform_indices = @transform_1, window_bounds = array<i64: 64, 64>}, {pipeline_mode = #tpu.pipeline_mode<synchronous>, transform_indices = @transform_2, window_bounds = array<i64: 1, 64>}, {pipeline_mode = #tpu.pipeline_mode<synchronous>, transform_indices = @transform_3, window_bounds = array<i64: 64, 32>}, {pipeline_mode = #tpu.pipeline_mode<synchronous>, transform_indices = @transform_4, window_bounds = array<i64: 1, 32>}, {pipeline_mode = #tpu.pipeline_mode<synchronous>, transform_indices = @transform_5, window_bounds = array<i64: 32, 1>}, {pipeline_mode = #tpu.pipeline_mode<synchronous>, transform_indices = @transform_6, window_bounds = array<i64: 1, 1>}, {transform_indices = @transform_7, window_bounds = array<i64: 1, 1, 8>}]} {
    %c0 = arith.constant 0 : index
    %c0_0 = arith.constant 0 : index
    %0 = vector.load %arg1[%c0, %c0_0] : memref<8x64xf32, #tpu.memory_space<vmem>>, vector<8x64xf32>
    %1 = arith.truncf %0 : vector<8x64xf32> to vector<8x64xbf16>
    %c0_1 = arith.constant 0 : index
    %c0_2 = arith.constant 0 : index
    %2 = vector.load %arg2[%c0_1, %c0_2] : memref<64x64xbf16, #tpu.memory_space<vmem>>, vector<64x64xbf16>
    %cst = arith.constant dense<0.000000e+00> : vector<8x64xf32>
    %3 = tpu.matmul %1, %2, %cst {dimension_numbers = #tpu.dot_dimension_numbers<[1], [0], [0], [1], [0, 0, 1, 1], [], []>} : vector<8x64xbf16>, vector<64x64xbf16>, vector<8x64xf32> -> vector<8x64xf32>
    %c0_3 = arith.constant 0 : index
    %c0_4 = arith.constant 0 : index
    %4 = vector.load %arg3[%c0_3, %c0_4] : memref<1x64xf32, #tpu.memory_space<vmem>>, vector<1x64xf32>
    %5 = vector.broadcast %4 : vector<1x64xf32> to vector<8x64xf32>
    %6 = arith.addf %3, %5 : vector<8x64xf32>
    %cst_5 = arith.constant 0.000000e+00 : f32
    %7 = vector.broadcast %cst_5 : f32 to vector<8x64xf32>
    %8 = arith.maximumf %6, %7 : vector<8x64xf32>
    %9 = arith.truncf %8 : vector<8x64xf32> to vector<8x64xbf16>
    %c0_6 = arith.constant 0 : index
    %c0_7 = arith.constant 0 : index
    %10 = vector.load %arg4[%c0_6, %c0_7] : memref<64x32xbf16, #tpu.memory_space<vmem>>, vector<64x32xbf16>
    %cst_8 = arith.constant dense<0.000000e+00> : vector<8x32xf32>
    %11 = tpu.matmul %9, %10, %cst_8 {dimension_numbers = #tpu.dot_dimension_numbers<[1], [0], [0], [1], [0, 0, 1, 1], [], []>} : vector<8x64xbf16>, vector<64x32xbf16>, vector<8x32xf32> -> vector<8x32xf32>
    %c0_9 = arith.constant 0 : index
    %c0_10 = arith.constant 0 : index
    %12 = vector.load %arg5[%c0_9, %c0_10] : memref<1x32xf32, #tpu.memory_space<vmem>>, vector<1x32xf32>
    %13 = vector.broadcast %12 : vector<1x32xf32> to vector<8x32xf32>
    %14 = arith.addf %11, %13 : vector<8x32xf32>
    %cst_11 = arith.constant 0.000000e+00 : f32
    %15 = vector.broadcast %cst_11 : f32 to vector<8x32xf32>
    %16 = arith.maximumf %14, %15 : vector<8x32xf32>
    %17 = tpu.transpose %16, [1, 0] : vector<8x32xf32> -> vector<32x8xf32>
    %c0_12 = arith.constant 0 : index
    %c0_13 = arith.constant 0 : index
    %18 = vector.load %arg6[%c0_12, %c0_13] : memref<32x1xf32, #tpu.memory_space<vmem>>, vector<32x1xf32>
    %19 = vector.broadcast %18 : vector<32x1xf32> to vector<32x8xf32>
    %20 = arith.mulf %17, %19 : vector<32x8xf32>
    %cst_14 = arith.constant dense<0.000000e+00> : vector<8xf32>
    %21 = vector.multi_reduction <add>, %20, %cst_14 [0] : vector<32x8xf32> to vector<8xf32>
    %22 = vector.shape_cast %21 : vector<8xf32> to vector<1x8xf32>
    %c0_15 = arith.constant 0 : index
    %c0_16 = arith.constant 0 : index
    %23 = vector.load %arg7[%c0_15, %c0_16] : memref<1x1xf32, #tpu.memory_space<vmem>>, vector<1x1xf32>
    %24 = vector.broadcast %23 : vector<1x1xf32> to vector<1x8xf32>
    %25 = arith.addf %22, %24 : vector<1x8xf32>
    %cst_17 = arith.constant 0.000000e+00 : f32
    %26 = vector.broadcast %cst_17 : f32 to vector<1x8xf32>
    %27 = arith.subf %26, %25 : vector<1x8xf32>
    %28 = math.exp %27 : vector<1x8xf32>
    %cst_18 = arith.constant 1.000000e+00 : f32
    %29 = vector.broadcast %cst_18 : f32 to vector<1x8xf32>
    %30 = arith.addf %29, %28 : vector<1x8xf32>
    %cst_19 = arith.constant 1.000000e+00 : f32
    %31 = vector.broadcast %cst_19 : f32 to vector<1x8xf32>
    %32 = arith.divf %31, %30 : vector<1x8xf32>
    %cst_20 = arith.constant 9.99999997E-7 : f32
    %cst_21 = arith.constant 0.999998986 : f32
    %33 = vector.broadcast %cst_20 : f32 to vector<1x8xf32>
    %34 = arith.maximumf %33, %32 : vector<1x8xf32>
    %35 = vector.broadcast %cst_21 : f32 to vector<1x8xf32>
    %36 = arith.minimumf %35, %34 : vector<1x8xf32>
    %37 = vector.shape_cast %36 : vector<1x8xf32> to vector<1x1x8xf32>
    %c0_22 = arith.constant 0 : index
    %c0_23 = arith.constant 0 : index
    %c0_24 = arith.constant 0 : index
    %38 = vector.load %arg8[%c0_22, %c0_23, %c0_24] : memref<1x1x8xf32, #tpu.memory_space<vmem>>, vector<1x1x8xf32>
    tpu.vector_store %arg8[%c0_22, %c0_23, %c0_24], %37 {strides = array<i32>} : memref<1x1x8xf32, #tpu.memory_space<vmem>>, vector<1x1x8xf32>,
    return
  }
  func.func @transform_0(%arg0: i32) -> (i32, i32) {
    %c0_i32 = arith.constant 0 : i32
    %c0_i32_0 = arith.constant 0 : i32
    return %arg0, %c0_i32 : i32, i32
  }
  func.func @transform_1(%arg0: i32) -> (i32, i32) {
    %c0_i32 = arith.constant 0 : i32
    %c0_i32_0 = arith.constant 0 : i32
    %c0_i32_1 = arith.constant 0 : i32
    return %c0_i32, %c0_i32_0 : i32, i32
  }
  func.func @transform_2(%arg0: i32) -> (i32, i32) {
    %c0_i32 = arith.constant 0 : i32
    %c0_i32_0 = arith.constant 0 : i32
    %c0_i32_1 = arith.constant 0 : i32
    return %c0_i32, %c0_i32_0 : i32, i32
  }
  func.func @transform_3(%arg0: i32) -> (i32, i32) {
    %c0_i32 = arith.constant 0 : i32
    %c0_i32_0 = arith.constant 0 : i32
    %c0_i32_1 = arith.constant 0 : i32
    return %c0_i32, %c0_i32_0 : i32, i32
  }
  func.func @transform_4(%arg0: i32) -> (i32, i32) {
    %c0_i32 = arith.constant 0 : i32
    %c0_i32_0 = arith.constant 0 : i32
    %c0_i32_1 = arith.constant 0 : i32
    return %c0_i32, %c0_i32_0 : i32, i32
  }
  func.func @transform_5(%arg0: i32) -> (i32, i32) {
    %c0_i32 = arith.constant 0 : i32
    %c0_i32_0 = arith.constant 0 : i32
    %c0_i32_1 = arith.constant 0 : i32
    return %c0_i32, %c0_i32_0 : i32, i32
  }
  func.func @transform_6(%arg0: i32) -> (i32, i32) {
    %c0_i32 = arith.constant 0 : i32
    %c0_i32_0 = arith.constant 0 : i32
    %c0_i32_1 = arith.constant 0 : i32
    return %c0_i32, %c0_i32_0 : i32, i32
  }
  func.func @transform_7(%arg0: i32) -> (i32, i32, i32) {
    %c0_i32 = arith.constant 0 : i32
    %c0_i32_0 = arith.constant 0 : i32
    %c0_i32_1 = arith.constant 0 : i32
    return %arg0, %c0_i32, %c0_i32_0 : i32, i32, i32
  }
}

</mosaic_0001>

<llo_original>
// kernel: tpu_custom_call.1
$region0: #{tpu_custom_call.1}
  #allocation0 [shape = 'u32[]', space=smem, size = 0x4, offset = 0x4, fixed_abs, tag = 'smem constant byte address 0x4 - core index']
  #allocation1 [shape = 'u32[144,128]{1,0:T(1,128)}', space=vmem, size = 0x12000, scoped, tag = 'internal scratch']
  #allocation2 [shape = 'f32[1,1]{1,0:T(1,128)S(1)}', space=vmem, size = 0x200, scoped, tag = 'scoped memory for tpu_custom_call.1']
  %s0 = inlined_call_operand.vmem [shape: f32[8,64], index: 0, kind: input, shape index: {}]
  %s1 = inlined_call_operand.vmem [shape: bf16[64,64], index: 1, kind: input, shape index: {}]
  %s2 = inlined_call_operand.vmem [shape: f32[1,64], index: 2, kind: input, shape index: {}]
  %s3 = inlined_call_operand.vmem [shape: bf16[64,32], index: 3, kind: input, shape index: {}]
  %s4 = inlined_call_operand.vmem [shape: f32[1,32], index: 4, kind: input, shape index: {}]
  %s5 = inlined_call_operand.vmem [shape: f32[32,1], index: 5, kind: input, shape index: {}]
  %s6 = inlined_call_operand.<no memory space> [shape: f32[1,1], index: 6, kind: input, shape index: {}]
  %s7 = inlined_call_operand.hbm [shape: f32[1,1,8], index: 7, kind: output, shape index: {}]
  %s8 = sld [smem:[#allocation0]]
  $region38: #{tpu_custom_call.1} parent=0
    _
  %s10 = ssub.s32 1, %s8
  %s11 = scalar_select 0, %s10, %s8
  %v12 = vstv %s6
  %13 = vst [vmem:[#allocation2] sm:$0x1] %v12
  $region1: #{tpu_custom_call.1} parent=0
    #allocation3 [shape = 'u8[512]{0}', space=vmem, size = 0x400, scoped, tag = 'output window, operand 0, single buffered']
    #allocation4 [shape = 's32[1]{0}', space=sflag, size = 0x4, scoped, tag = 'scoped memory for tpu_custom_call.1']
    %14 = vsyncpa [#allocation4], 0
    // Predicated region
    $region2: #{tpu_custom_call.1} parent=1 // pred_check
      _
    $region3: #{tpu_custom_call.1} parent=1 // pred_check_branch
      %16 = sbr.rel (0) target = $region5
    $region4: #{tpu_custom_call.1} parent=1 // pred_region
      _
    $region5: #{tpu_custom_call.1} parent=1 // pred_fallthru
      _
    // Predicated region
    $region6: #{tpu_custom_call.1} parent=1 // pred_check
      _
    $region7: #{tpu_custom_call.1} parent=1 // pred_check_branch
      %18 = sbr.rel (0) target = $region9
    $region8: #{tpu_custom_call.1} parent=1 // pred_region
      _
    $region9: #{tpu_custom_call.1} parent=1 // pred_fallthru
      _
    // Predicated region
    $region10: #{tpu_custom_call.1} parent=1 // pred_check
      _
    $region11: #{tpu_custom_call.1} parent=1 // pred_check_branch
      %20 = sbr.rel (0) target = $region13
    $region12: #{tpu_custom_call.1} parent=1 // pred_region
      _
    $region13: #{tpu_custom_call.1} parent=1 // pred_fallthru
      _
    // Predicated region
    $region14: #{tpu_custom_call.1} parent=1 // pred_check
      _
    $region15: #{tpu_custom_call.1} parent=1 // pred_check_branch
      %22 = sbr.rel (0) target = $region17
    $region16: #{tpu_custom_call.1} parent=1 // pred_region
      _
    $region17: #{tpu_custom_call.1} parent=1 // pred_fallthru
      _
    // Predicated region
    $region18: #{tpu_custom_call.1} parent=1 // pred_check
      _
    $region19: #{tpu_custom_call.1} parent=1 // pred_check_branch
      %24 = sbr.rel (0) target = $region21
    $region20: #{tpu_custom_call.1} parent=1 // pred_region
      _
    $region21: #{tpu_custom_call.1} parent=1 // pred_fallthru
      _
    // Predicated region
    $region22: #{tpu_custom_call.1} parent=1 // pred_check
      _
    $region23: #{tpu_custom_call.1} parent=1 // pred_check_branch
      %26 = sbr.rel (0) target = $region25
    $region24: #{tpu_custom_call.1} parent=1 // pred_region
      _
    $region25: #{tpu_custom_call.1} parent=1 // pred_fallthru
      _
    // Predicated region
    $region26: #{tpu_custom_call.1} parent=1 // pred_check
      _
    $region27: #{tpu_custom_call.1} parent=1 // pred_check_branch
      %28 = sbr.rel (0) target = $region29
    $region28: #{tpu_custom_call.1} parent=1 // pred_region
      _
    $region29: #{tpu_custom_call.1} parent=1 // pred_fallthru
      _
    %v30 = vld [vmem:[%s0] sm:$0xff]
    %v31 = vpack.c.bf16 %v30, %v30
    %v32 = vld [vmem:[%s1] sm:$0xf]
    %v33 = vld [vmem:[%s1 + $0x4] sm:$0xf]
    %v34 = vld [vmem:[%s1 + $0x8] sm:$0xf]
    %v35 = vld [vmem:[%s1 + $0xc] sm:$0xf]
    %v36 = vld [vmem:[%s1 + $0x10] sm:$0xf]
    %v37 = vld [vmem:[%s1 + $0x14] sm:$0xf]
    %v38 = vld [vmem:[%s1 + $0x18] sm:$0xf]
    %v39 = vld [vmem:[%s1 + $0x1c] sm:$0xf]
    %v40 = vld [vmem:[%s2] sm:$0x1]
    %v42 = vlaneseq
    %v43 = vshrl.u32 %v42, 7
    %v44 = vsub.s32 0, %v43
    %v45 = vrot.slane %v40, %v44
    %v55 = vunpack.c.l.b16 %v32
    %v56 = vunpack.c.l.b16 %v33
    %v57 = vunpack.c.l.b16 %v34
    %v58 = vunpack.c.l.b16 %v35
    %v59 = vunpack.c.l.b16 %v36
    %v60 = vunpack.c.l.b16 %v37
    %v61 = vunpack.c.l.b16 %v38
    %v62 = vunpack.c.l.b16 %v39
    %v63 = vpack.c.b16 %v56, %v55
    %v64 = vpack.c.b16 %v58, %v57
    %v65 = vpack.c.b16 %v60, %v59
    %v66 = vpack.c.b16 %v62, %v61
    %vm71 = vcmask 523264
    %v73 = vsel %vm71, %v31, 0
    %75 = vmatprep.subr.bf16.mxu0 0
    %76 = vmatpush1.bf16.msra.mxu0 %v63
    %77 = vmatprep.subr.bf16.mxu0 0
    %78 = vmatpush1.bf16.msra.mxu0 %v64
    %79 = vmatprep.subr.bf16.mxu0 0
    %80 = vmatpush1.bf16.msra.mxu0 %v65
    %81 = vmatprep.subr.bf16.mxu0 0
    %82 = vmatpush1.bf16.msra.mxu0 %v66
    %83 = vmatprep.subr.bf16.mxu0 0
    %84 = vmatpush1.bf16.msra.mxu0 0
    %85 = vmatprep.subr.bf16.mxu0 0
    %86 = vmatpush1.bf16.msra.mxu0 0
    %87 = vmatprep.subr.bf16.mxu0 0
    %88 = vmatpush1.bf16.msra.mxu0 0
    %89 = vmatprep.subr.bf16.mxu0 0
    %90 = vmatpush1.bf16.msra.mxu0 0
    %91 = vmatprep.subr.bf16.mxu0 0
    %92 = vmatpush1.bf16.msra.mxu0 0
    %93 = vmatprep.subr.bf16.mxu0 0
    %94 = vmatpush1.bf16.msra.mxu0 0
    %95 = vmatprep.subr.bf16.mxu0 0
    %96 = vmatpush1.bf16.msra.mxu0 0
    %97 = vmatprep.subr.bf16.mxu0 0
    %98 = vmatpush1.bf16.msra.mxu0 0
    %99 = vmatprep.subr.bf16.mxu0 0
    %100 = vmatpush1.bf16.msra.mxu0 0
    %101 = vmatprep.subr.bf16.mxu0 0
    %102 = vmatpush1.bf16.msra.mxu0 0
    %103 = vmatprep.subr.bf16.mxu0 0
    %104 = vmatpush1.bf16.msra.mxu0 0
    %105 = vmatprep.subr.bf16.mxu0 0
    %106 = vmatpush1.bf16.msra.mxu0 0
    %107 = vmatprep.mubr.bf16.mxu0 0
    %108 = vmatmul.mubr.bf16.gmra.mrb[0].mxu0 %v73
    %v109 = vpop.f32.mrb[0].mxu0
    %v110 = vadd.f32 %v45, %v109
    %v111 = vpop.f32.mrb[0].mxu0
    %v112 = vpop.f32.mrb[0].mxu0
    %v113 = vpop.f32.mrb[0].mxu0
    %114 = vdwg.mxu0
    %v115 = vmax.f32 %v110, 0.0
    %v116 = vpack.c.bf16 %v115, %v115
    %v117 = vld [vmem:[%s3] sm:$0xf]
    %v118 = vld [vmem:[%s3 + $0x4] sm:$0xf]
    %v119 = vld [vmem:[%s3 + $0x8] sm:$0xf]
    %v120 = vld [vmem:[%s3 + $0xc] sm:$0xf]
    %v121 = vld [vmem:[%s3 + $0x10] sm:$0xf]
    %v122 = vld [vmem:[%s3 + $0x14] sm:$0xf]
    %v123 = vld [vmem:[%s3 + $0x18] sm:$0xf]
    %v124 = vld [vmem:[%s3 + $0x1c] sm:$0xf]
    %v125 = vld [vmem:[%s4] sm:$0x1]
    %v127 = vlaneseq
    %v128 = vshrl.u32 %v127, 7
    %v129 = vsub.s32 0, %v128
    %v130 = vrot.slane %v125, %v129
    %v140 = vunpack.c.l.b16 %v117
    %v141 = vunpack.c.l.b16 %v118
    %v142 = vunpack.c.l.b16 %v119
    %v143 = vunpack.c.l.b16 %v120
    %v144 = vunpack.c.l.b16 %v121
    %v145 = vunpack.c.l.b16 %v122
    %v146 = vunpack.c.l.b16 %v123
    %v147 = vunpack.c.l.b16 %v124
    %v148 = vpack.c.b16 %v141, %v140
    %v149 = vpack.c.b16 %v143, %v142
    %v150 = vpack.c.b16 %v145, %v144
    %v151 = vpack.c.b16 %v147, %v146
    %v157 = vsel %vm71, %v116, 0
    %159 = vmatprep.subr.bf16.mxu0 0
    %160 = vmatpush1.bf16.msra.mxu0 %v148
    %161 = vmatprep.subr.bf16.mxu0 0
    %162 = vmatpush1.bf16.msra.mxu0 %v149
    %163 = vmatprep.subr.bf16.mxu0 0
    %164 = vmatpush1.bf16.msra.mxu0 %v150
    %165 = vmatprep.subr.bf16.mxu0 0
    %166 = vmatpush1.bf16.msra.mxu0 %v151
    %167 = vmatprep.subr.bf16.mxu0 0
    %168 = vmatpush1.bf16.msra.mxu0 0
    %169 = vmatprep.subr.bf16.mxu0 0
    %170 = vmatpush1.bf16.msra.mxu0 0
    %171 = vmatprep.subr.bf16.mxu0 0
    %172 = vmatpush1.bf16.msra.mxu0 0
    %173 = vmatprep.subr.bf16.mxu0 0
    %174 = vmatpush1.bf16.msra.mxu0 0
    %175 = vmatprep.subr.bf16.mxu0 0
    %176 = vmatpush1.bf16.msra.mxu0 0
    %177 = vmatprep.subr.bf16.mxu0 0
    %178 = vmatpush1.bf16.msra.mxu0 0
    %179 = vmatprep.subr.bf16.mxu0 0
    %180 = vmatpush1.bf16.msra.mxu0 0
    %181 = vmatprep.subr.bf16.mxu0 0
    %182 = vmatpush1.bf16.msra.mxu0 0
    %183 = vmatprep.subr.bf16.mxu0 0
    %184 = vmatpush1.bf16.msra.mxu0 0
    %185 = vmatprep.subr.bf16.mxu0 0
    %186 = vmatpush1.bf16.msra.mxu0 0
    %187 = vmatprep.subr.bf16.mxu0 0
    %188 = vmatpush1.bf16.msra.mxu0 0
    %189 = vmatprep.subr.bf16.mxu0 0
    %190 = vmatpush1.bf16.msra.mxu0 0
    %191 = vmatprep.mubr.bf16.mxu0 0
    %192 = vmatmul.mubr.bf16.gmra.mrb[0].mxu0 %v157
    %v193 = vpop.f32.mrb[0].mxu0
    %v194 = vadd.f32 %v130, %v193
    %v195 = vpop.f32.mrb[0].mxu0
    %v196 = vpop.f32.mrb[0].mxu0
    %v197 = vpop.f32.mrb[0].mxu0
    %198 = vdwg.mxu0
    %v199 = vmax.f32 %v194, 0.0
    %200 = vxpose.xlu0.b32.start [1/16] %v199, 128
    %201 = vxpose.xlu0.b32.cont [2/16] 0.0, 128
    %202 = vxpose.xlu0.b32.cont [3/16] 0.0, 128
    %203 = vxpose.xlu0.b32.cont [4/16] 0.0, 128
    %204 = vxpose.xlu0.b32.cont [5/16] 0.0, 128
    %205 = vxpose.xlu0.b32.cont [6/16] 0.0, 128
    %206 = vxpose.xlu0.b32.cont [7/16] 0.0, 128
    %207 = vxpose.xlu0.b32.cont [8/16] 0.0, 128
    %208 = vxpose.xlu0.b32.cont [9/16] 0.0, 128
    %209 = vxpose.xlu0.b32.cont [10/16] 0.0, 128
    %210 = vxpose.xlu0.b32.cont [11/16] 0.0, 128
    %211 = vxpose.xlu0.b32.cont [12/16] 0.0, 128
    %212 = vxpose.xlu0.b32.cont [13/16] 0.0, 128
    %213 = vxpose.xlu0.b32.cont [14/16] 0.0, 128
    %214 = vxpose.xlu0.b32.cont [15/16] 0.0, 128
    %215 = vxpose.xlu0.b32.end [16/16] 0.0, 128
    %v216 = vpop.trf.xlu0
    %v217 = vpop.trf.xlu0
    %v218 = vpop.trf.xlu0
    %v219 = vpop.trf.xlu0
    %v220 = vpop.trf.xlu0
    %v221 = vpop.trf.xlu0
    %v222 = vpop.trf.xlu0
    %v223 = vpop.trf.xlu0
    %v224 = vpop.trf.xlu0
    %v225 = vpop.trf.xlu0
    %v226 = vpop.trf.xlu0
    %v227 = vpop.trf.xlu0
    %v228 = vpop.trf.xlu0
    %v229 = vpop.trf.xlu0
    %v230 = vpop.trf.xlu0
    %v231 = vpop.trf.xlu0
    %v232 = vld [vmem:[%s5] sm:$0xff]
    %v233 = vld [vmem:[%s5 + $0x8] sm:$0xff]
    %v234 = vld [vmem:[%s5 + $0x10] sm:$0xff]
    %v235 = vld [vmem:[%s5 + $0x18] sm:$0xff]
    %237 = vset.pattern.permute.xlu0 0
    %238 = vperm.xlu0 %237, %v232
    %v239 = vpop.permute.xlu0 %238
    %242 = vset.pattern.permute.xlu0 0
    %243 = vperm.xlu0 %242, %v233
    %v244 = vpop.permute.xlu0 %243
    %247 = vset.pattern.permute.xlu0 0
    %248 = vperm.xlu0 %247, %v234
    %v249 = vpop.permute.xlu0 %248
    %252 = vset.pattern.permute.xlu0 0
    %253 = vperm.xlu0 %252, %v235
    %v254 = vpop.permute.xlu0 %253
    %v256 = vmul.f32 %v216, %v239
    %v257 = vmul.f32 %v217, %v244
    %v258 = vmul.f32 %v218, %v249
    %v259 = vmul.f32 %v219, %v254
    %vm260 = vcmask 64512
    %v261 = vsel %vm260, %v256, 0.0
    %v262 = vsel %vm260, %v257, 0.0
    %v263 = vadd.f32 %v261, %v262
    %v264 = vsel %vm260, %v258, 0.0
    %v265 = vadd.f32 %v263, %v264
    %v266 = vsel %vm260, %v259, 0.0
    %v267 = vadd.f32 %v265, %v266
    %v268 = vrot.slane %v267, 4
    %v269 = vadd.f32 %v267, %v268
    %v270 = vrot.slane %v269, 2
    %v271 = vadd.f32 %v269, %v270
    %v272 = vrot.slane %v271, 1
    %v273 = vadd.f32 %v271, %v272
    %v274 = vld [vmem:[#allocation2] sm:$0x1]
    %276 = vset.pattern.permute.xlu0 0
    %277 = vperm.xlu0 %276, %v274
    %v278 = vpop.permute.xlu0 %277
    %v280 = vlaneseq
    %v281 = vshrl.u32 %v280, 7
    %v282 = vsub.s32 0, %v281
    %v283 = vrot.slane %v278, %v282
    %v284 = vadd.f32 %v273, %v283
    %v285 = vsub.f32 0.0, %v284
    %v286 = vmul.f32 %v285, 1.442695
    %v287 = vpow.pop %v286
    %v288 = vadd.f32 %v287, 1.0
    %v289 = vrcp.pop %v288
    %v290 = vmul.f32 1.0, %v289
    %v291 = vmax.f32 %v290, 1e-06
    %v292 = vmin.f32 %v291, 0.999999
    %vm293 = vcmask 57344
    %294 = vst.msk [vmem:[#allocation3] sm:$0x1] %vm293, %v292
    // Predicated region
    $region30: #{tpu_custom_call.1} parent=1 // pred_check
      _
    $region31: #{tpu_custom_call.1} parent=1 // pred_check_branch
      %296 = sbr.rel (0) target = $region33
    $region32: #{tpu_custom_call.1} parent=1 // pred_region
      %s298 = ssub.s32 16, 16
      %299 = vsyncadd [#allocation4], %s298
      %s301 = sshll.u32 [#allocation3], 4
      %s302 = int_to_ptr.vmem [resolvable:$true] %s301
      %304 = dma.vmem_to_hbm [thread:$0]  %s302, 16, %s7, [#allocation4]
    $region33: #{tpu_custom_call.1} parent=1 // pred_fallthru
      _
    // Predicated region
    $region34: #{tpu_custom_call.1} parent=1 // pred_check
      _
    $region35: #{tpu_custom_call.1} parent=1 // pred_check_branch
      %306 = sbr.rel (0) target = $region37
    $region36: #{tpu_custom_call.1} parent=1 // pred_region
      %307 = dma.done [#allocation4], 16
    $region37: #{tpu_custom_call.1} parent=1 // pred_fallthru
      _
    %308 = vsyncpa [#allocation4], 1

</llo_original>
